<compile_context>
chip_gen: v7x
topology: tpu7x:2x2x1
jax: 0.10.0
libtpu: 0.0.40
codegen_flags: <defaults>
</compile_context>

<pallas_src>
import jax
import jax.numpy as jnp
from jax.experimental import pallas as pl
from jax.experimental.pallas import tpu as pltpu


def _round_up(x, m):
    return (x + m - 1) // m * m


def hybrid_embed_kernel(patches_ref, w_ref, bias_ref, out_ref):
    # patches: (TILE_N, Kpad) bf16   w: (Kpad, Dpad) bf16   bias: (1, Dpad) f32
    y = jnp.dot(patches_ref[...], w_ref[...],
                preferred_element_type=jnp.float32)   # fused stem+embed+BN scale
    y = y + bias_ref[...]                             # folded BN bias (f32, VPU)
    out_ref[...] = y * jax.nn.sigmoid(y)              # SiLU (sigmoid -> EUP slot)


def hybrid_embed(x_nchw, w_stem, w_embed, gamma, beta, run_mean, run_var,
                 eps=1e-5, tile_n=2048):
    """x_nchw: (B, 3, H, W) float32.  Returns (B, H'*W', dims) float32."""
    B, Cin, H, W = x_nchw.shape
    Cstem = w_stem.shape[0]                      # 40
    dims = w_embed.shape[0]
    k, stride, pad = 3, 4, 1
    Ho = (H + 2 * pad - k) // stride + 1
    Wo = (W + 2 * pad - k) // stride + 1
    N = B * Ho * Wo
    K = Cin * k * k                              # 27

    # ---- glue: im2col (channels-last); flatten order (cin, kh, kw) matches
    #      torch weight.reshape(Cout, Cin*k*k) ----
    x = jnp.transpose(x_nchw, (0, 2, 3, 1))                      # (B, H, W, Cin)
    x = jnp.pad(x, ((0, 0), (pad, pad), (pad, pad), (0, 0)))
    taps = []
    for kh in range(k):
        for kw in range(k):
            taps.append(x[:, kh:kh + stride * (Ho - 1) + 1:stride,
                            kw:kw + stride * (Wo - 1) + 1:stride, :])
    patches = jnp.stack(taps, axis=-1).reshape(N, K)

    # ---- glue: fold conv_stem @ embed_matcher and the BN scale into one weight
    wstem_mat = w_stem.reshape(Cstem, K).T                       # (27, 40)
    wembed_mat = w_embed.reshape(dims, Cstem).T                  # (40, dims)
    inv_std = 1.0 / jnp.sqrt(run_var + eps)
    scale = gamma * inv_std                                      # (dims,)
    bias = beta - run_mean * scale                               # (dims,)
    w_fused = (wstem_mat @ wembed_mat) * scale[None, :]          # (27, dims)

    # ---- padding for TPU-friendly layouts ----
    Kpad = _round_up(K, 32)                   # sublane-aligned patches slab
    Dpad = _round_up(dims, 128)               # lane-dense output stores
    tile = max(8, min(tile_n, _round_up(N, 8)))
    Npad = _round_up(N, tile)

    patches_p = jnp.pad(patches, ((0, Npad - N), (0, Kpad - K))).astype(jnp.bfloat16)
    w_p = jnp.pad(w_fused, ((0, Kpad - K), (0, Dpad - dims))).astype(jnp.bfloat16)
    bias_p = jnp.pad(bias[None, :], ((0, 0), (0, Dpad - dims))).astype(jnp.float32)

    cost = pl.CostEstimate(
        flops=2 * Npad * Kpad * Dpad,
        transcendentals=Npad * Dpad,
        bytes_accessed=(patches_p.size * 2 + w_p.size * 2 + bias_p.size * 4
                        + Npad * Dpad * 4))

    out = pl.pallas_call(
        hybrid_embed_kernel,
        out_shape=jax.ShapeDtypeStruct((Npad, Dpad), jnp.float32),
        grid=(Npad // tile,),
        in_specs=[
            pl.BlockSpec((tile, Kpad), lambda i: (i, 0)),   # row-tiled stream
            pl.BlockSpec((Kpad, Dpad), lambda i: (0, 0)),   # resident fused weight
            pl.BlockSpec((1, Dpad), lambda i: (0, 0)),      # resident bias
        ],
        out_specs=pl.BlockSpec((tile, Dpad), lambda i: (i, 0)),
        compiler_params=pltpu.CompilerParams(
            dimension_semantics=("parallel",)),
        cost_estimate=cost,
    )(patches_p, w_p, bias_p)

    return out[:N, :dims].reshape(B, Ho * Wo, dims)


def _reference(x_nchw, w_stem, w_embed, gamma, beta, run_mean, run_var,
               eps=1e-5):
    """Pure-JAX f32 reference of the same forward (for sanity checking)."""
    feats = jax.lax.conv_general_dilated(
        x_nchw, w_stem, window_strides=(4, 4), padding=((1, 1), (1, 1)),
        dimension_numbers=("NCHW", "OIHW", "NCHW"))
    y = jax.lax.conv_general_dilated(
        feats, w_embed, window_strides=(1, 1), padding="VALID",
        dimension_numbers=("NCHW", "OIHW", "NCHW"))
    sc = (gamma / jnp.sqrt(run_var + eps)).reshape(1, -1, 1, 1)
    bi = (beta - run_mean * gamma / jnp.sqrt(run_var + eps)).reshape(1, -1, 1, 1)
    y = y * sc + bi
    y = y * jax.nn.sigmoid(y)
    B, C, H, W = y.shape
    return jnp.transpose(y.reshape(B, C, H * W), (0, 2, 1))


if __name__ == "__main__":
    key = jax.random.PRNGKey(0)
    k0, k1, k2, k3, k4, k5, k6 = jax.random.split(key, 7)

    B, Cin, H, W = 2, 3, 16, 16          # conv_stem is Conv2d(3, 40, ...)
    dims = 32
    Cstem = 40

    x = jax.random.normal(k0, (B, Cin, H, W), dtype=jnp.float32)
    w_stem = 0.1 * jax.random.normal(k1, (Cstem, Cin, 3, 3), dtype=jnp.float32)
    w_embed = 0.1 * jax.random.normal(k2, (dims, Cstem, 1, 1), dtype=jnp.float32)
    gamma = 1.0 + 0.1 * jax.random.normal(k3, (dims,), dtype=jnp.float32)
    beta = 0.1 * jax.random.normal(k4, (dims,), dtype=jnp.float32)
    run_mean = 0.1 * jax.random.normal(k5, (dims,), dtype=jnp.float32)
    run_var = jnp.abs(jax.random.normal(k6, (dims,), dtype=jnp.float32)) + 0.5

    out = hybrid_embed(x, w_stem, w_embed, gamma, beta, run_mean, run_var)
    out = jax.block_until_ready(out)

    ref = _reference(x, w_stem, w_embed, gamma, beta, run_mean, run_var)
    assert out.shape == (B, 4 * 4, dims), out.shape
    # bf16 MXU path -> looser tolerance than a pure-f32 comparison.
    assert jnp.allclose(out, ref, atol=3e-2, rtol=3e-2), \
        float(jnp.max(jnp.abs(out - ref)))

    print("KERNEL_OK")
</pallas_src>

<mosaic_0001>
module attributes {stable_mosaic.version = 11 : i64} {
  func.func @hybrid_embed_kernel(%arg0: i32, %arg1: memref<32x32xbf16, #tpu.memory_space<vmem>>, %arg2: memref<32x128xbf16, #tpu.memory_space<vmem>>, %arg3: memref<1x128xf32, #tpu.memory_space<vmem>>, %arg4: memref<32x128xf32, #tpu.memory_space<vmem>>) attributes {dimension_semantics = [#tpu.dimension_semantics<parallel>], iteration_bounds = array<i64: 1>, scalar_prefetch = 0 : i64, scratch_operands = 0 : i64, tpu.core_type = #tpu.core_type<tc>, window_params = [{transform_indices = @transform_0, window_bounds = array<i64: 32, 32>}, {pipeline_mode = #tpu.pipeline_mode<synchronous>, transform_indices = @transform_1, window_bounds = array<i64: 32, 128>}, {pipeline_mode = #tpu.pipeline_mode<synchronous>, transform_indices = @transform_2, window_bounds = array<i64: 1, 128>}, {transform_indices = @transform_3, window_bounds = array<i64: 32, 128>}]} {
    %c0 = arith.constant 0 : index
    %c0_0 = arith.constant 0 : index
    %0 = vector.load %arg1[%c0, %c0_0] : memref<32x32xbf16, #tpu.memory_space<vmem>>, vector<32x32xbf16>
    %c0_1 = arith.constant 0 : index
    %c0_2 = arith.constant 0 : index
    %1 = vector.load %arg2[%c0_1, %c0_2] : memref<32x128xbf16, #tpu.memory_space<vmem>>, vector<32x128xbf16>
    %cst = arith.constant dense<0.000000e+00> : vector<32x128xf32>
    %2 = tpu.matmul %0, %1, %cst {dimension_numbers = #tpu.dot_dimension_numbers<[1], [0], [0], [1], [0, 0, 1, 1], [], []>} : vector<32x32xbf16>, vector<32x128xbf16>, vector<32x128xf32> -> vector<32x128xf32>
    %c0_3 = arith.constant 0 : index
    %c0_4 = arith.constant 0 : index
    %3 = vector.load %arg3[%c0_3, %c0_4] : memref<1x128xf32, #tpu.memory_space<vmem>>, vector<1x128xf32>
    %4 = vector.broadcast %3 : vector<1x128xf32> to vector<32x128xf32>
    %5 = arith.addf %2, %4 : vector<32x128xf32>
    %6 = arith.negf %5 : vector<32x128xf32>
    %7 = math.exp %6 : vector<32x128xf32>
    %cst_5 = arith.constant 1.000000e+00 : f32
    %8 = vector.broadcast %cst_5 : f32 to vector<32x128xf32>
    %9 = arith.addf %8, %7 : vector<32x128xf32>
    %10 = arith.divf %8, %9 : vector<32x128xf32>
    %11 = arith.mulf %5, %10 : vector<32x128xf32>
    %c0_6 = arith.constant 0 : index
    %c0_7 = arith.constant 0 : index
    %12 = vector.load %arg4[%c0_6, %c0_7] : memref<32x128xf32, #tpu.memory_space<vmem>>, vector<32x128xf32>
    tpu.vector_store %arg4[%c0_6, %c0_7], %11 {strides = array<i32>} : memref<32x128xf32, #tpu.memory_space<vmem>>, vector<32x128xf32>,
    return
  }
  func.func @transform_0(%arg0: i32) -> (i32, i32) {
    %c0_i32 = arith.constant 0 : i32
    %c0_i32_0 = arith.constant 0 : i32
    return %arg0, %c0_i32 : i32, i32
  }
  func.func @transform_1(%arg0: i32) -> (i32, i32) {
    %c0_i32 = arith.constant 0 : i32
    %c0_i32_0 = arith.constant 0 : i32
    %c0_i32_1 = arith.constant 0 : i32
    return %c0_i32, %c0_i32_0 : i32, i32
  }
  func.func @transform_2(%arg0: i32) -> (i32, i32) {
    %c0_i32 = arith.constant 0 : i32
    %c0_i32_0 = arith.constant 0 : i32
    %c0_i32_1 = arith.constant 0 : i32
    return %c0_i32, %c0_i32_0 : i32, i32
  }
  func.func @transform_3(%arg0: i32) -> (i32, i32) {
    %c0_i32 = arith.constant 0 : i32
    %c0_i32_0 = arith.constant 0 : i32
    return %arg0, %c0_i32 : i32, i32
  }
}

</mosaic_0001>

<llo_original>
// kernel: tpu_custom_call.1
$region0: #{tpu_custom_call.1}
  #allocation0 [shape = 'u32[]', space=smem, size = 0x4, offset = 0x4, fixed_abs, tag = 'smem constant byte address 0x4 - core index']
  #allocation1 [shape = 'u32[144,128]{1,0:T(1,128)}', space=vmem, size = 0x12000, scoped, tag = 'internal scratch']
  %s0 = inlined_call_operand.hbm [shape: bf16[32,32], index: 0, kind: input, shape index: {}]
  %s1 = inlined_call_operand.hbm [shape: bf16[32,128], index: 1, kind: input, shape index: {}]
  %s2 = inlined_call_operand.vmem [shape: f32[1,128], index: 2, kind: input, shape index: {}]
  %s3 = inlined_call_operand.hbm [shape: f32[32,128], index: 3, kind: output, shape index: {}]
  %s4 = sld [smem:[#allocation0]]
  $region30: #{tpu_custom_call.1} parent=0
    _
  %s6 = ssub.s32 1, %s4
  %s7 = scalar_select 0, %s6, %s4
  $region1: #{tpu_custom_call.1} parent=0
    #allocation2 [shape = 'u8[8192]{0}', space=vmem, size = 0x2000, scoped, tag = 'input window, operand 0, single buffered']
    #allocation3 [shape = 's32[1]{0}', space=sflag, size = 0x4, scoped, tag = 'scoped memory for tpu_custom_call.1']
    #allocation4 [shape = 's32[1]{0}', space=sflag, size = 0x4, scoped, tag = 'scoped memory for tpu_custom_call.1']
    #allocation5 [shape = 'u8[8192]{0}', space=vmem, size = 0x2000, scoped, tag = 'input window, operand 1, single buffered']
    #allocation6 [shape = 's32[1]{0}', space=sflag, size = 0x4, scoped, tag = 'scoped memory for tpu_custom_call.1']
    #allocation7 [shape = 'u8[16384]{0}', space=vmem, size = 0x4000, scoped, tag = 'output window, operand 0, single buffered']
    %8 = vsyncpa [#allocation3], 0
    %9 = vsyncpa [#allocation6], 0
    %10 = vsyncpa [#allocation4], 0
    // Predicated region
    $region2: #{tpu_custom_call.1} parent=1 // pred_check
      _
    $region3: #{tpu_custom_call.1} parent=1 // pred_check_branch
      %12 = sbr.rel (0) target = $region5
    $region4: #{tpu_custom_call.1} parent=1 // pred_region
      %s14 = ssub.s32 256, 256
      %15 = vsyncadd [#allocation3], %s14
      %s16 = sshll.u32 [#allocation2], 4
      %s17 = int_to_ptr.vmem [resolvable:$true] %s16
      %22 = dma.hbm_to_vmem [thread:$0]  %s0, 256, %s17, [#allocation3], 64, 64, 4
    $region5: #{tpu_custom_call.1} parent=1 // pred_fallthru
      _
    // Predicated region
    $region6: #{tpu_custom_call.1} parent=1 // pred_check
      _
    $region7: #{tpu_custom_call.1} parent=1 // pred_check_branch
      %24 = sbr.rel (0) target = $region9
    $region8: #{tpu_custom_call.1} parent=1 // pred_region
      %s26 = ssub.s32 256, 256
      %27 = vsyncadd [#allocation6], %s26
      %s28 = sshll.u32 [#allocation5], 4
      %s29 = int_to_ptr.vmem [resolvable:$true] %s28
      %34 = dma.hbm_to_vmem [thread:$0]  %s1, 256, %s29, [#allocation6], 64, 64, 4
    $region9: #{tpu_custom_call.1} parent=1 // pred_fallthru
      _
    // Predicated region
    $region10: #{tpu_custom_call.1} parent=1 // pred_check
      _
    $region11: #{tpu_custom_call.1} parent=1 // pred_check_branch
      %36 = sbr.rel (0) target = $region13
    $region12: #{tpu_custom_call.1} parent=1 // pred_region
      _
    $region13: #{tpu_custom_call.1} parent=1 // pred_fallthru
      _
    // Predicated region
    $region14: #{tpu_custom_call.1} parent=1 // pred_check
      _
    $region15: #{tpu_custom_call.1} parent=1 // pred_check_branch
      %38 = sbr.rel (0) target = $region17
    $region16: #{tpu_custom_call.1} parent=1 // pred_region
      %39 = dma.done [#allocation3], 256
    $region17: #{tpu_custom_call.1} parent=1 // pred_fallthru
      _
    // Predicated region
    $region18: #{tpu_custom_call.1} parent=1 // pred_check
      _
    $region19: #{tpu_custom_call.1} parent=1 // pred_check_branch
      %41 = sbr.rel (0) target = $region21
    $region20: #{tpu_custom_call.1} parent=1 // pred_region
      %42 = dma.done [#allocation6], 256
    $region21: #{tpu_custom_call.1} parent=1 // pred_fallthru
      _
    %v44 = vld [vmem:[#allocation2] sm:$0xf]
    %v45 = vld [vmem:[#allocation2 + $0x4] sm:$0xf]
    %v46 = vld [vmem:[#allocation2 + $0x8] sm:$0xf]
    %v47 = vld [vmem:[#allocation2 + $0xc] sm:$0xf]
    %v48 = vld [vmem:[#allocation5] sm:$0xf]
    %v49 = vld [vmem:[#allocation5 + $0x4] sm:$0xf]
    %v50 = vld [vmem:[#allocation5 + $0x8] sm:$0xf]
    %v51 = vld [vmem:[#allocation5 + $0xc] sm:$0xf]
    %v52 = vld [vmem:[%s2] sm:$0x1]
    %v54 = vlaneseq
    %v55 = vshrl.u32 %v54, 7
    %v56 = vsub.s32 0, %v55
    %v57 = vrot.slane %v52, %v56
    %v63 = vunpack.c.l.b16 %v44
    %v64 = vunpack.c.l.b16 %v45
    %v65 = vunpack.c.l.b16 %v46
    %v66 = vunpack.c.l.b16 %v47
    %v67 = vpack.c.b16 %v64, %v63
    %v68 = vpack.c.b16 %v66, %v65
    %v73 = vunpack.c.l.b16 %v48
    %v74 = vunpack.c.l.b16 %v49
    %v75 = vunpack.c.l.b16 %v50
    %v76 = vunpack.c.l.b16 %v51
    %v77 = vpack.c.b16 %v74, %v73
    %v78 = vpack.c.b16 %v76, %v75
    %vm81 = vcmask 261120
    %v83 = vsel %vm81, %v67, 0
    %v86 = vsel %vm81, %v68, 0
    %88 = vmatprep.subr.bf16.mxu0 0
    %89 = vmatpush1.bf16.msra.mxu0 %v77
    %90 = vmatprep.subr.bf16.mxu0 0
    %91 = vmatpush1.bf16.msra.mxu0 %v78
    %92 = vmatprep.subr.bf16.mxu0 0
    %93 = vmatpush1.bf16.msra.mxu0 0
    %94 = vmatprep.subr.bf16.mxu0 0
    %95 = vmatpush1.bf16.msra.mxu0 0
    %96 = vmatprep.subr.bf16.mxu0 0
    %97 = vmatpush1.bf16.msra.mxu0 0
    %98 = vmatprep.subr.bf16.mxu0 0
    %99 = vmatpush1.bf16.msra.mxu0 0
    %100 = vmatprep.subr.bf16.mxu0 0
    %101 = vmatpush1.bf16.msra.mxu0 0
    %102 = vmatprep.subr.bf16.mxu0 0
    %103 = vmatpush1.bf16.msra.mxu0 0
    %104 = vmatprep.subr.bf16.mxu0 0
    %105 = vmatpush1.bf16.msra.mxu0 0
    %106 = vmatprep.subr.bf16.mxu0 0
    %107 = vmatpush1.bf16.msra.mxu0 0
    %108 = vmatprep.subr.bf16.mxu0 0
    %109 = vmatpush1.bf16.msra.mxu0 0
    %110 = vmatprep.subr.bf16.mxu0 0
    %111 = vmatpush1.bf16.msra.mxu0 0
    %112 = vmatprep.subr.bf16.mxu0 0
    %113 = vmatpush1.bf16.msra.mxu0 0
    %114 = vmatprep.subr.bf16.mxu0 0
    %115 = vmatpush1.bf16.msra.mxu0 0
    %116 = vmatprep.subr.bf16.mxu0 0
    %117 = vmatpush1.bf16.msra.mxu0 0
    %118 = vmatprep.subr.bf16.mxu0 0
    %119 = vmatpush1.bf16.msra.mxu0 0
    %120 = vmatprep.mubr.bf16.mxu0 0
    %121 = vmatmul.mubr.bf16.gmra.mrb[0].mxu0 %v83
    %v122 = vpop.f32.mrb[0].mxu0
    %v123 = vadd.f32 %v57, %v122
    %v124 = vpop.f32.mrb[0].mxu0
    %v125 = vpop.f32.mrb[0].mxu0
    %v126 = vadd.f32 %v57, %v125
    %v127 = vpop.f32.mrb[0].mxu0
    %128 = vmatprep.mubr.bf16.mxu0 0
    %129 = vmatmul.mubr.bf16.gmra.mrb[0].mxu0 %v86
    %v130 = vpop.f32.mrb[0].mxu0
    %v131 = vadd.f32 %v57, %v130
    %v132 = vpop.f32.mrb[0].mxu0
    %v133 = vpop.f32.mrb[0].mxu0
    %v134 = vadd.f32 %v57, %v133
    %v135 = vpop.f32.mrb[0].mxu0
    %136 = vdwg.mxu0
    %v137 = vxor.u32 %v123, 2147483648
    %v138 = vxor.u32 %v126, 2147483648
    %v139 = vxor.u32 %v131, 2147483648
    %v140 = vxor.u32 %v134, 2147483648
    %v141 = vmul.f32 %v137, 1.442695
    %v142 = vpow.pop %v141
    %v143 = vmul.f32 %v138, 1.442695
    %v144 = vpow.pop %v143
    %v145 = vmul.f32 %v139, 1.442695
    %v146 = vpow.pop %v145
    %v147 = vmul.f32 %v140, 1.442695
    %v148 = vpow.pop %v147
    %v149 = vadd.f32 %v142, 1.0
    %v150 = vadd.f32 %v144, 1.0
    %v151 = vadd.f32 %v146, 1.0
    %v152 = vadd.f32 %v148, 1.0
    %v153 = vrcp.pop %v149
    %v154 = vmul.f32 1.0, %v153
    %v155 = vrcp.pop %v150
    %v156 = vmul.f32 1.0, %v155
    %v157 = vrcp.pop %v151
    %v158 = vmul.f32 1.0, %v157
    %v159 = vrcp.pop %v152
    %v160 = vmul.f32 1.0, %v159
    %v161 = vmul.f32 %v123, %v154
    %v162 = vmul.f32 %v126, %v156
    %v163 = vmul.f32 %v131, %v158
    %v164 = vmul.f32 %v134, %v160
    %165 = vst [vmem:[#allocation7] sm:$0xff] %v161
    %166 = vst [vmem:[#allocation7 + $0x8] sm:$0xff] %v162
    %167 = vst [vmem:[#allocation7 + $0x10] sm:$0xff] %v163
    %168 = vst [vmem:[#allocation7 + $0x18] sm:$0xff] %v164
    // Predicated region
    $region22: #{tpu_custom_call.1} parent=1 // pred_check
      _
    $region23: #{tpu_custom_call.1} parent=1 // pred_check_branch
      %170 = sbr.rel (0) target = $region25
    $region24: #{tpu_custom_call.1} parent=1 // pred_region
      %s172 = ssub.s32 512, 512
      %173 = vsyncadd [#allocation4], %s172
      %s174 = sshll.u32 [#allocation7], 4
      %s175 = int_to_ptr.vmem [resolvable:$true] %s174
      %180 = dma.vmem_to_hbm [thread:$0]  %s175, 512, %s3, [#allocation4], 128, 128, 8
    $region25: #{tpu_custom_call.1} parent=1 // pred_fallthru
      _
    // Predicated region
    $region26: #{tpu_custom_call.1} parent=1 // pred_check
      _
    $region27: #{tpu_custom_call.1} parent=1 // pred_check_branch
      %182 = sbr.rel (0) target = $region29
    $region28: #{tpu_custom_call.1} parent=1 // pred_region
      %183 = dma.done [#allocation4], 512
    $region29: #{tpu_custom_call.1} parent=1 // pred_fallthru
      _
    %184 = vsyncpa [#allocation3], 1
    %185 = vsyncpa [#allocation6], 1
    %186 = vsyncpa [#allocation4], 1

</llo_original>
